<compile_context>
chip_gen: v7x
topology: tpu7x:2x2x1
jax: 0.10.0
libtpu: 0.0.40
codegen_flags: <defaults>
</compile_context>

<pallas_src>
import jax
import jax.numpy as jnp
from jax.experimental import pallas as pl
from jax.experimental.pallas import tpu as pltpu

_LANE = 128      # points per lane row (TPU lane width)
_TM_MAX = 2048   # max sublane rows (of 128 points) per grid step


def _sin_loss_kernel(p_ref, g_ref, out_ref):
    # p_ref, g_ref: (3, tm, 128) component planes in VMEM
    # out_ref:      (8, 128) f32 VMEM block; holds this block's scalar partial
    #               sum broadcast across the block (lane-dense, unmasked store).
    px = p_ref[0].astype(jnp.float32)
    py = p_ref[1].astype(jnp.float32)
    pz = p_ref[2].astype(jnp.float32)
    gx = g_ref[0].astype(jnp.float32)
    gy = g_ref[1].astype(jnp.float32)
    gz = g_ref[2].astype(jnp.float32)

    # cross product components (per point), full (tm, 128) vreg-dense tiles
    cx = py * gz - pz * gy
    cy = pz * gx - px * gz
    cz = px * gy - py * gx

    # per-point |cross| (sqrt on the EUP), reduced to this block's partial sum
    total = jnp.sum(jnp.sqrt(cx * cx + cy * cy + cz * cz))
    out_ref[...] = jnp.full((8, _LANE), total, dtype=jnp.float32)


def sin_loss(pred, gt):
    """JAX/Pallas equivalent of the PyTorch sin_loss.forward."""
    p = jnp.reshape(pred, (-1, 3))
    g = jnp.reshape(gt, (-1, 3))
    n = p.shape[0]

    r = -(-n // _LANE)                 # rows of 128 points
    if r <= _TM_MAX:                   # small N: one block covers everything
        nb, tm = 1, r
    else:                              # balance rows across blocks, multiple of 8
        nb = -(-r // _TM_MAX)
        tm = -(-r // nb)
        tm = -(-tm // 8) * 8
    r_pad = nb * tm
    n_pad = r_pad * _LANE

    # (n, 3) AoS -> (3, r_pad, 128) SoA component planes. allow_input_fusion
    # below lets XLA fuse this pad + transpose into the pallas_call input fetch
    # instead of materializing both full arrays in HBM first.
    # TODO(synk): produce the SoA (3, R, 128) layout (optionally bf16) upstream
    # to remove this reshaping from the loss path entirely.
    def to_planes(x):
        x = jnp.pad(x, ((0, n_pad - n), (0, 0)))                     # zeros -> zero norm
        return jnp.transpose(x.reshape(r_pad, _LANE, 3), (2, 0, 1))  # (3, R, 128)

    p3 = to_planes(p)
    g3 = to_planes(g)

    partials = pl.pallas_call(
        _sin_loss_kernel,
        out_shape=jax.ShapeDtypeStruct((nb * 8, _LANE), jnp.float32),
        grid_spec=pltpu.PrefetchScalarGridSpec(
            num_scalar_prefetch=0,
            grid=(nb,),
            in_specs=[
                pl.BlockSpec((3, tm, _LANE), lambda i: (0, i, 0)),
                pl.BlockSpec((3, tm, _LANE), lambda i: (0, i, 0)),
            ],
            out_specs=pl.BlockSpec((8, _LANE), lambda i: (i, 0)),
        ),
        compiler_params=pltpu.CompilerParams(
            dimension_semantics=("parallel",),     # independent blocks -> v7x dual-TC
            allow_input_fusion=[True, True],       # fuse to_planes into input fetch
            vmem_limit_bytes=32 * 1024 * 1024,     # ~12 MiB of buffers at tm=2048
        ),
    )(p3, g3)

    # each block's scalar partial sum lives at row 8*i, lane 0
    return jnp.sum(partials[::8, 0]) / jnp.float32(n)


def _sin_loss_ref(pred, gt):
    p = jnp.reshape(pred, (-1, 3)).astype(jnp.float32)
    g = jnp.reshape(gt, (-1, 3)).astype(jnp.float32)
    c = jnp.cross(p, g, axis=-1)
    return jnp.mean(jnp.linalg.norm(c, ord=2, axis=-1))


if __name__ == "__main__":
    key = jax.random.PRNGKey(0)
    k1, k2, k3, k4 = jax.random.split(key, 4)

    # small point-cloud-like inputs: batch=2, 100 points, xyz
    pred = jax.random.normal(k1, (2, 100, 3), dtype=jnp.float32)
    gt = jax.random.normal(k2, (2, 100, 3), dtype=jnp.float32)
    out = jax.block_until_ready(sin_loss(pred, gt))
    ref = _sin_loss_ref(pred, gt)
    assert jnp.allclose(out, ref, rtol=1e-5, atol=1e-5), (out, ref)

    # larger input that exercises the multi-block ("parallel" grid > 1) path
    pred2 = jax.random.normal(k3, (300000, 3), dtype=jnp.float32)
    gt2 = jax.random.normal(k4, (300000, 3), dtype=jnp.float32)
    out2 = jax.block_until_ready(sin_loss(pred2, gt2))
    ref2 = _sin_loss_ref(pred2, gt2)
    assert jnp.allclose(out2, ref2, rtol=1e-4, atol=1e-5), (out2, ref2)

    print("KERNEL_OK")
</pallas_src>

<mosaic_0001>
module attributes {stable_mosaic.version = 11 : i64} {
  func.func @_sin_loss_kernel(%arg0: i32, %arg1: memref<3x2x128xf32, #tpu.memory_space<vmem>>, %arg2: memref<3x2x128xf32, #tpu.memory_space<vmem>>, %arg3: memref<8x128xf32, #tpu.memory_space<vmem>>) attributes {dimension_semantics = [#tpu.dimension_semantics<parallel>], iteration_bounds = array<i64: 1>, scalar_prefetch = 0 : i64, scratch_operands = 0 : i64, tpu.core_type = #tpu.core_type<tc>, window_params = [{transform_indices = @transform_0, window_bounds = array<i64: 3, 2, 128>}, {transform_indices = @transform_1, window_bounds = array<i64: 3, 2, 128>}, {transform_indices = @transform_2, window_bounds = array<i64: 8, 128>}]} {
    %c0 = arith.constant 0 : index
    %c0_0 = arith.constant 0 : index
    %c0_1 = arith.constant 0 : index
    %0 = vector.load %arg1[%c0, %c0_0, %c0_1] : memref<3x2x128xf32, #tpu.memory_space<vmem>>, vector<1x2x128xf32>
    %1 = vector.shape_cast %0 : vector<1x2x128xf32> to vector<2x128xf32>
    %c1 = arith.constant 1 : index
    %c0_2 = arith.constant 0 : index
    %c0_3 = arith.constant 0 : index
    %2 = vector.load %arg1[%c1, %c0_2, %c0_3] : memref<3x2x128xf32, #tpu.memory_space<vmem>>, vector<1x2x128xf32>
    %3 = vector.shape_cast %2 : vector<1x2x128xf32> to vector<2x128xf32>
    %c2 = arith.constant 2 : index
    %c0_4 = arith.constant 0 : index
    %c0_5 = arith.constant 0 : index
    %4 = vector.load %arg1[%c2, %c0_4, %c0_5] : memref<3x2x128xf32, #tpu.memory_space<vmem>>, vector<1x2x128xf32>
    %5 = vector.shape_cast %4 : vector<1x2x128xf32> to vector<2x128xf32>
    %c0_6 = arith.constant 0 : index
    %c0_7 = arith.constant 0 : index
    %c0_8 = arith.constant 0 : index
    %6 = vector.load %arg2[%c0_6, %c0_7, %c0_8] : memref<3x2x128xf32, #tpu.memory_space<vmem>>, vector<1x2x128xf32>
    %7 = vector.shape_cast %6 : vector<1x2x128xf32> to vector<2x128xf32>
    %c1_9 = arith.constant 1 : index
    %c0_10 = arith.constant 0 : index
    %c0_11 = arith.constant 0 : index
    %8 = vector.load %arg2[%c1_9, %c0_10, %c0_11] : memref<3x2x128xf32, #tpu.memory_space<vmem>>, vector<1x2x128xf32>
    %9 = vector.shape_cast %8 : vector<1x2x128xf32> to vector<2x128xf32>
    %c2_12 = arith.constant 2 : index
    %c0_13 = arith.constant 0 : index
    %c0_14 = arith.constant 0 : index
    %10 = vector.load %arg2[%c2_12, %c0_13, %c0_14] : memref<3x2x128xf32, #tpu.memory_space<vmem>>, vector<1x2x128xf32>
    %11 = vector.shape_cast %10 : vector<1x2x128xf32> to vector<2x128xf32>
    %12 = arith.mulf %3, %11 : vector<2x128xf32>
    %13 = arith.mulf %5, %9 : vector<2x128xf32>
    %14 = arith.subf %12, %13 : vector<2x128xf32>
    %15 = arith.mulf %5, %7 : vector<2x128xf32>
    %16 = arith.mulf %1, %11 : vector<2x128xf32>
    %17 = arith.subf %15, %16 : vector<2x128xf32>
    %18 = arith.mulf %1, %9 : vector<2x128xf32>
    %19 = arith.mulf %3, %7 : vector<2x128xf32>
    %20 = arith.subf %18, %19 : vector<2x128xf32>
    %21 = arith.mulf %14, %14 : vector<2x128xf32>
    %22 = arith.mulf %17, %17 : vector<2x128xf32>
    %23 = arith.addf %21, %22 : vector<2x128xf32>
    %24 = arith.mulf %20, %20 : vector<2x128xf32>
    %25 = arith.addf %23, %24 : vector<2x128xf32>
    %26 = math.sqrt %25 : vector<2x128xf32>
    %27 = vector.shape_cast %26 : vector<2x128xf32> to vector<1x2x128xf32>
    %cst = arith.constant dense<0.000000e+00> : vector<1xf32>
    %28 = vector.multi_reduction <add>, %27, %cst [1, 2] : vector<1x2x128xf32> to vector<1xf32>
    %29 = vector.shape_cast %28 : vector<1xf32> to vector<1x1x1xf32>
    %30 = vector.extract %29[0, 0, 0] : f32 from vector<1x1x1xf32>
    %31 = vector.broadcast %30 : f32 to vector<8x128xf32>
    %c0_15 = arith.constant 0 : index
    %c0_16 = arith.constant 0 : index
    %32 = vector.load %arg3[%c0_15, %c0_16] : memref<8x128xf32, #tpu.memory_space<vmem>>, vector<8x128xf32>
    tpu.vector_store %arg3[%c0_15, %c0_16], %31 {strides = array<i32>} : memref<8x128xf32, #tpu.memory_space<vmem>>, vector<8x128xf32>,
    return
  }
  func.func @transform_0(%arg0: i32) -> (i32, i32, i32) {
    %c0_i32 = arith.constant 0 : i32
    %c0_i32_0 = arith.constant 0 : i32
    %c0_i32_1 = arith.constant 0 : i32
    return %c0_i32, %arg0, %c0_i32_0 : i32, i32, i32
  }
  func.func @transform_1(%arg0: i32) -> (i32, i32, i32) {
    %c0_i32 = arith.constant 0 : i32
    %c0_i32_0 = arith.constant 0 : i32
    %c0_i32_1 = arith.constant 0 : i32
    return %c0_i32, %arg0, %c0_i32_0 : i32, i32, i32
  }
  func.func @transform_2(%arg0: i32) -> (i32, i32) {
    %c0_i32 = arith.constant 0 : i32
    %c0_i32_0 = arith.constant 0 : i32
    return %arg0, %c0_i32 : i32, i32
  }
}

</mosaic_0001>

<llo_original>
// kernel: tpu_custom_call.1
$region0: #{tpu_custom_call.1}
  #allocation0 [shape = 'u32[]', space=smem, size = 0x4, offset = 0x4, fixed_abs, tag = 'smem constant byte address 0x4 - core index']
  #allocation1 [shape = 'u32[144,128]{1,0:T(1,128)}', space=vmem, size = 0x12000, scoped, tag = 'internal scratch']
  %s0 = inlined_call_operand.hbm [shape: f32[3,2,128], index: 0, kind: input, shape index: {}]
  %s1 = inlined_call_operand.hbm [shape: f32[3,2,128], index: 1, kind: input, shape index: {}]
  %s2 = inlined_call_operand.hbm [shape: f32[8,128], index: 2, kind: output, shape index: {}]
  %s3 = sld [smem:[#allocation0]]
  $region26: #{tpu_custom_call.1} parent=0
    _
  %s5 = ssub.s32 1, %s3
  %s6 = scalar_select 0, %s5, %s3
  $region1: #{tpu_custom_call.1} parent=0
    #allocation2 [shape = 'u8[3072]{0}', space=vmem, size = 0xc00, scoped, tag = 'input window, operand 0, single buffered']
    #allocation3 [shape = 's32[1]{0}', space=sflag, size = 0x4, scoped, tag = 'scoped memory for tpu_custom_call.1']
    #allocation4 [shape = 's32[1]{0}', space=sflag, size = 0x4, scoped, tag = 'scoped memory for tpu_custom_call.1']
    #allocation5 [shape = 'u8[3072]{0}', space=vmem, size = 0xc00, scoped, tag = 'input window, operand 1, single buffered']
    #allocation6 [shape = 's32[1]{0}', space=sflag, size = 0x4, scoped, tag = 'scoped memory for tpu_custom_call.1']
    #allocation7 [shape = 'u8[4096]{0}', space=vmem, size = 0x1000, scoped, tag = 'output window, operand 0, single buffered']
    %7 = vsyncpa [#allocation3], 0
    %8 = vsyncpa [#allocation6], 0
    %9 = vsyncpa [#allocation4], 0
    // Predicated region
    $region2: #{tpu_custom_call.1} parent=1 // pred_check
      _
    $region3: #{tpu_custom_call.1} parent=1 // pred_check_branch
      %11 = sbr.rel (0) target = $region5
    $region4: #{tpu_custom_call.1} parent=1 // pred_region
      %s13 = ssub.s32 96, 96
      %14 = vsyncadd [#allocation3], %s13
      %s15 = sshll.u32 [#allocation2], 4
      %s16 = int_to_ptr.vmem [resolvable:$true] %s15
      %21 = dma.hbm_to_vmem [thread:$0]  %s0, 96, %s16, [#allocation3], 32, 32, 2
    $region5: #{tpu_custom_call.1} parent=1 // pred_fallthru
      _
    // Predicated region
    $region6: #{tpu_custom_call.1} parent=1 // pred_check
      _
    $region7: #{tpu_custom_call.1} parent=1 // pred_check_branch
      %23 = sbr.rel (0) target = $region9
    $region8: #{tpu_custom_call.1} parent=1 // pred_region
      %s25 = ssub.s32 96, 96
      %26 = vsyncadd [#allocation6], %s25
      %s27 = sshll.u32 [#allocation5], 4
      %s28 = int_to_ptr.vmem [resolvable:$true] %s27
      %33 = dma.hbm_to_vmem [thread:$0]  %s1, 96, %s28, [#allocation6], 32, 32, 2
    $region9: #{tpu_custom_call.1} parent=1 // pred_fallthru
      _
    // Predicated region
    $region10: #{tpu_custom_call.1} parent=1 // pred_check
      _
    $region11: #{tpu_custom_call.1} parent=1 // pred_check_branch
      %35 = sbr.rel (0) target = $region13
    $region12: #{tpu_custom_call.1} parent=1 // pred_region
      %36 = dma.done [#allocation3], 96
    $region13: #{tpu_custom_call.1} parent=1 // pred_fallthru
      _
    // Predicated region
    $region14: #{tpu_custom_call.1} parent=1 // pred_check
      _
    $region15: #{tpu_custom_call.1} parent=1 // pred_check_branch
      %38 = sbr.rel (0) target = $region17
    $region16: #{tpu_custom_call.1} parent=1 // pred_region
      %39 = dma.done [#allocation6], 96
    $region17: #{tpu_custom_call.1} parent=1 // pred_fallthru
      _
    %v40 = vld [vmem:[#allocation2] sm:$0x3]
    %s41 = scalar_lea.vmem [#allocation2], 2
    %v42 = vld [vmem:[%s41] sm:$0x3]
    %s43 = scalar_lea.vmem [#allocation2], 4
    %v44 = vld [vmem:[%s43] sm:$0x3]
    %v45 = vld [vmem:[#allocation5] sm:$0x3]
    %s46 = scalar_lea.vmem [#allocation5], 2
    %v47 = vld [vmem:[%s46] sm:$0x3]
    %s48 = scalar_lea.vmem [#allocation5], 4
    %v49 = vld [vmem:[%s48] sm:$0x3]
    %v50 = vmul.f32 %v42, %v49
    %v51 = vmul.f32 %v44, %v47
    %v52 = vsub.f32 %v50, %v51
    %v53 = vmul.f32 %v44, %v45
    %v54 = vmul.f32 %v40, %v49
    %v55 = vsub.f32 %v53, %v54
    %v56 = vmul.f32 %v40, %v47
    %v57 = vmul.f32 %v42, %v45
    %v58 = vsub.f32 %v56, %v57
    %v59 = vmul.f32 %v52, %v52
    %v60 = vmul.f32 %v55, %v55
    %v61 = vadd.f32 %v59, %v60
    %v62 = vmul.f32 %v58, %v58
    %v63 = vadd.f32 %v61, %v62
    %v64 = vrsqrt.pop %v63
    %v65 = vmul.f32 %v63, %v64
    %vm66 = vcmp.eq.f32.partialorder %v63, inf
    %v67 = vsel %vm66, %v63, %v65
    %vm68 = vcmp.eq.f32.partialorder %v63, 0.0
    %v69 = vand.u32 %v63, 2147483648
    %v70 = vsel %vm68, %v69, %v67
    %vm71 = vcmask 1041408
    %v72 = vsel %vm71, %v70, 0.0
    %73 = vadd.xlane.f32.xlu0 %v72
    %v74 = vpop.xlane.xlu0 %73
    %v75 = vrot.slane %v74, 4
    %v76 = vadd.f32 %v74, %v75
    %v77 = vrot.slane %v76, 2
    %v78 = vadd.f32 %v76, %v77
    %v79 = vrot.slane %v78, 1
    %v80 = vadd.f32 %v78, %v79
    %s81 = vtos %v80
    %v82 = vstv %s81
    %83 = vst [vmem:[#allocation7] sm:$0xff] %v82
    // Predicated region
    $region18: #{tpu_custom_call.1} parent=1 // pred_check
      _
    $region19: #{tpu_custom_call.1} parent=1 // pred_check_branch
      %85 = sbr.rel (0) target = $region21
    $region20: #{tpu_custom_call.1} parent=1 // pred_region
      %s87 = ssub.s32 128, 128
      %88 = vsyncadd [#allocation4], %s87
      %s90 = sshll.u32 [#allocation7], 4
      %s91 = int_to_ptr.vmem [resolvable:$true] %s90
      %93 = dma.vmem_to_hbm [thread:$0]  %s91, 128, %s2, [#allocation4]
    $region21: #{tpu_custom_call.1} parent=1 // pred_fallthru
      _
    // Predicated region
    $region22: #{tpu_custom_call.1} parent=1 // pred_check
      _
    $region23: #{tpu_custom_call.1} parent=1 // pred_check_branch
      %95 = sbr.rel (0) target = $region25
    $region24: #{tpu_custom_call.1} parent=1 // pred_region
      %96 = dma.done [#allocation4], 128
    $region25: #{tpu_custom_call.1} parent=1 // pred_fallthru
      _
    %97 = vsyncpa [#allocation3], 1
    %98 = vsyncpa [#allocation6], 1
    %99 = vsyncpa [#allocation4], 1

</llo_original>
